<compile_context>
chip_gen: v6e
topology: v6e:2x2x1
jax: 0.10.0
libtpu: 0.0.40
codegen_flags: <defaults>
</compile_context>

<pallas_src>
import functools

import jax
import jax.numpy as jnp
from jax import lax
from jax.experimental import pallas as pl
from jax.experimental.pallas import tpu as pltpu


def _round_up(a, m):
    return -(-a // m) * m


def _cdiv(a, b):
    return -(-a // b)


def _choose_grid(batch, seq, itemsize, target_bytes=2 << 20):
    """Pick (rows_per_block, num_blocks, padded_batch).

    Targets ~2 MiB tiles, keeps batch padding small (< 8 rows per block), and
    guarantees >= 2 blocks (v7x megacore) whenever that costs almost no padding.
    """
    tb = max(8, (target_bytes // max(1, seq * itemsize)) // 8 * 8)
    nb = _cdiv(batch, tb)
    if nb == 1:
        # One block would leave a v7x TensorCore idle; split in two only if the
        # resulting 8-row-alignment padding is negligible (< batch/16 rows).
        pad2 = 2 * _round_up(_cdiv(batch, 2), 8) - batch
        if batch >= 16 and pad2 * 16 <= batch:
            nb = 2
        else:
            # Single block spanning the full batch (block dim == array dim is
            # exempt from the 8-sublane divisibility rule) -> no padding.
            return batch, 1, batch
    tb = _round_up(_cdiv(batch, nb), 8)   # balanced rows, sublane aligned
    return tb, nb, nb * tb


def _random_adjacent_swap_kernel(seed_ref, x_ref, o_ref, *, thresh_u32, col_bits):
    TB, S = x_ref.shape                 # S is the TRUE sequence length (lane axis)
    x = x_ref[...]

    # ---- Bernoulli(p) bits: counter-based hash of (seed, global element id) ----
    # All math stays in uint32 (VPU only); counter uses the global row so the
    # stream is independent of the block size / grid position.
    row = (lax.broadcasted_iota(jnp.int32, (TB, S), 0)
           + pl.program_id(0) * TB).astype(jnp.uint32)
    col = lax.broadcasted_iota(jnp.int32, (TB, S), 1)
    idx = (row << col_bits) | col.astype(jnp.uint32)
    s = seed_ref[0].astype(jnp.uint32) * jnp.uint32(0x9E3779B9)   # scalar mix
    h = (idx ^ s) * jnp.uint32(0x85EBCA6B)
    h = h ^ (h >> 13)
    h = h * jnp.uint32(0xC2B2AE35)
    h = h ^ (h >> 16)

    # ---- mask with the last column forced off (bitwise, no int multiplies) ----
    not_last = (col < (S - 1)).astype(jnp.int32)
    m1 = (h < jnp.uint32(thresh_u32)).astype(jnp.int32) & not_last

    # ---- one-shot de-conflict (matches torch): m2[j] = m1[j] & ~m1[j-1] ----
    # roll wrap-around is harmless because m1[:, -1] == 0.
    m2 = m1 & (jnp.roll(m1, 1, axis=1) ^ 1)

    # ---- apply adjacent swaps via the delta formulation (3 rolls total) ----
    #   delta[j]   = x[j+1] - x[j]   where j initiates a swap, else 0
    #   out        = x + delta - roll(delta, 1)
    x_next = jnp.roll(x, -1, axis=1)
    delta = jnp.where(m2 != 0, x_next - x, 0)
    o_ref[...] = (x + delta - jnp.roll(delta, 1, axis=1)).astype(o_ref.dtype)


def random_adjacent_swap(x, seed, p):
    """JAX/Pallas equivalent of RandomAdjacentSwap on token ids x of shape (B, S)."""
    B, S = x.shape
    p = float(p)
    if p <= 0.0:
        return x                        # eval mode / no-op: skip the kernel entirely
    p = min(p, 1.0)
    # NOTE: p == 1.0 maps to swap prob (2^32-1)/2^32 (off by 2^-32, not bit-exact).
    thresh_u32 = min(int(round(p * 2.0 ** 32)), 2 ** 32 - 1)
    col_bits = max(1, (S - 1).bit_length())

    TB, NB, Bp = _choose_grid(B, S, x.dtype.itemsize)
    xp = x if Bp == B else jnp.pad(x, ((0, Bp - B), (0, 0)))

    kernel = functools.partial(_random_adjacent_swap_kernel,
                               thresh_u32=thresh_u32, col_bits=col_bits)
    out = pl.pallas_call(
        kernel,
        out_shape=jax.ShapeDtypeStruct((Bp, S), x.dtype),
        grid_spec=pltpu.PrefetchScalarGridSpec(
            num_scalar_prefetch=1,
            grid=(NB,),
            in_specs=[pl.BlockSpec((TB, S), lambda i, seed_ref: (i, 0))],
            out_specs=pl.BlockSpec((TB, S), lambda i, seed_ref: (i, 0)),
        ),
        compiler_params=pltpu.CompilerParams(
            dimension_semantics=("parallel",),
            vmem_limit_bytes=32 << 20,
        ),
    )(jnp.asarray([seed], dtype=jnp.int32), xp)

    if Bp != B:
        out = out[:B]
    return out


def random_adjacent_swap_module(batch_dict, *, key_in, key_out, p_train,
                                p_eval=0.0, training=True, seed=0):
    """Mimics RandomAdjacentSwap.forward on a batch dict."""
    p = p_train if training else p_eval
    out = dict(batch_dict)
    out[key_out] = random_adjacent_swap(batch_dict[key_in], seed, p)
    return out


if __name__ == "__main__":
    key = jax.random.PRNGKey(0)
    B, S, VOCAB = 8, 128, 1000
    x = jax.random.randint(key, (B, S), 0, VOCAB, dtype=jnp.int32)

    out_batch = random_adjacent_swap_module(
        {"tokens": x}, key_in="tokens", key_out="tokens_aug",
        p_train=0.3, training=True, seed=1234)
    y = jax.block_until_ready(out_batch["tokens_aug"])

    assert y.shape == x.shape and y.dtype == x.dtype
    # Adjacent swaps are a permutation within each row.
    assert bool(jnp.all(jnp.sort(y, axis=1) == jnp.sort(x, axis=1)))
    # Every changed element is explained by a swap with an adjacent neighbor.
    moved = y != x
    got_from_left = jnp.pad(y[:, 1:] == x[:, :-1], ((0, 0), (1, 0)))   # y[j] == x[j-1]
    got_from_right = jnp.pad(y[:, :-1] == x[:, 1:], ((0, 0), (0, 1)))  # y[j] == x[j+1]
    assert bool(jnp.all(~moved | got_from_left | got_from_right))

    # Eval mode (p_eval = 0.0) is the identity and never launches the kernel.
    y_eval = jax.block_until_ready(random_adjacent_swap(x, seed=1234, p=0.0))
    assert bool(jnp.all(y_eval == x))

    print("KERNEL_OK")
</pallas_src>

<mosaic_0001>
module attributes {stable_mosaic.version = 11 : i64} {
  func.func @_random_adjacent_swap_kernel(%arg0: i32, %arg1: memref<1xi32, #tpu.memory_space<smem>>, %arg2: memref<8x128xi32, #tpu.memory_space<vmem>>, %arg3: memref<8x128xi32, #tpu.memory_space<vmem>>) attributes {dimension_semantics = [#tpu.dimension_semantics<parallel>], iteration_bounds = array<i64: 1>, scalar_prefetch = 1 : i64, scratch_operands = 0 : i64, tpu.core_type = #tpu.core_type<tc>, window_params = [{transform_indices = @transform_0, window_bounds = array<i64: 8, 128>}, {transform_indices = @transform_1, window_bounds = array<i64: 8, 128>}]} {
    %c0 = arith.constant 0 : index
    %c0_0 = arith.constant 0 : index
    %0 = vector.load %arg2[%c0, %c0_0] : memref<8x128xi32, #tpu.memory_space<vmem>>, vector<8x128xi32>
    %1 = tpu.iota {dimensions = array<i32: 0>} : vector<8x128xi32>
    %c8_i32 = arith.constant 8 : i32
    %2 = arith.muli %arg0, %c8_i32 : i32
    %3 = vector.broadcast %2 : i32 to vector<8x128xi32>
    %4 = arith.addi %1, %3 : vector<8x128xi32>
    %5 = tpu.iota {dimensions = array<i32: 1>} : vector<8x128xi32>
    %c7_i32 = arith.constant 7 : i32
    %6 = vector.broadcast %c7_i32 : i32 to vector<8x128xi32>
    %7 = arith.shli %4, %6 : vector<8x128xi32>
    %8 = arith.ori %7, %5 : vector<8x128xi32>
    %c0_1 = arith.constant 0 : index
    %9 = memref.load %arg1[%c0_1] : memref<1xi32, #tpu.memory_space<smem>>
    %c-1640531527_i32 = arith.constant -1640531527 : i32
    %10 = arith.muli %9, %c-1640531527_i32 : i32
    %11 = vector.broadcast %10 : i32 to vector<8x128xi32>
    %12 = arith.xori %8, %11 : vector<8x128xi32>
    %c-2048144789_i32 = arith.constant -2048144789 : i32
    %13 = vector.broadcast %c-2048144789_i32 : i32 to vector<8x128xi32>
    %14 = arith.muli %12, %13 : vector<8x128xi32>
    %c13_i32 = arith.constant 13 : i32
    %15 = vector.broadcast %c13_i32 : i32 to vector<8x128xi32>
    %16 = arith.shrui %14, %15 : vector<8x128xi32>
    %17 = arith.xori %14, %16 : vector<8x128xi32>
    %c-1028477387_i32 = arith.constant -1028477387 : i32
    %18 = vector.broadcast %c-1028477387_i32 : i32 to vector<8x128xi32>
    %19 = arith.muli %17, %18 : vector<8x128xi32>
    %c16_i32 = arith.constant 16 : i32
    %20 = vector.broadcast %c16_i32 : i32 to vector<8x128xi32>
    %21 = arith.shrui %19, %20 : vector<8x128xi32>
    %22 = arith.xori %19, %21 : vector<8x128xi32>
    %c127_i32 = arith.constant 127 : i32
    %23 = vector.broadcast %c127_i32 : i32 to vector<8x128xi32>
    %24 = arith.cmpi slt, %5, %23 : vector<8x128xi32>
    %25 = arith.extui %24 : vector<8x128xi1> to vector<8x128xi32>
    %c1288490189_i32 = arith.constant 1288490189 : i32
    %26 = vector.broadcast %c1288490189_i32 : i32 to vector<8x128xi32>
    %27 = arith.cmpi ult, %22, %26 : vector<8x128xi32>
    %28 = arith.extui %27 : vector<8x128xi1> to vector<8x128xi32>
    %29 = arith.andi %28, %25 : vector<8x128xi32>
    %30 = vector.extract_strided_slice %29 {offsets = [0, 127], sizes = [8, 1], strides = [1, 1]} : vector<8x128xi32> to vector<8x1xi32>
    %31 = vector.extract_strided_slice %29 {offsets = [0, 0], sizes = [8, 127], strides = [1, 1]} : vector<8x128xi32> to vector<8x127xi32>
    %32 = tpu.concatenate %30, %31 in 1 : vector<8x1xi32>, vector<8x127xi32> -> vector<8x128xi32>
    %c1_i32 = arith.constant 1 : i32
    %33 = vector.broadcast %c1_i32 : i32 to vector<8x128xi32>
    %34 = arith.xori %32, %33 : vector<8x128xi32>
    %35 = arith.andi %29, %34 : vector<8x128xi32>
    %36 = vector.extract_strided_slice %0 {offsets = [0, 1], sizes = [8, 127], strides = [1, 1]} : vector<8x128xi32> to vector<8x127xi32>
    %37 = vector.extract_strided_slice %0 {offsets = [0, 0], sizes = [8, 1], strides = [1, 1]} : vector<8x128xi32> to vector<8x1xi32>
    %38 = tpu.concatenate %36, %37 in 1 : vector<8x127xi32>, vector<8x1xi32> -> vector<8x128xi32>
    %c0_i32 = arith.constant 0 : i32
    %39 = vector.broadcast %c0_i32 : i32 to vector<8x128xi32>
    %40 = arith.cmpi ne, %35, %39 : vector<8x128xi32>
    %41 = arith.subi %38, %0 : vector<8x128xi32>
    %c0_i32_2 = arith.constant 0 : i32
    %42 = vector.broadcast %c0_i32_2 : i32 to vector<8x128xi32>
    %43 = arith.select %40, %41, %42 : vector<8x128xi1>, vector<8x128xi32>
    %44 = arith.addi %0, %43 : vector<8x128xi32>
    %45 = vector.extract_strided_slice %43 {offsets = [0, 127], sizes = [8, 1], strides = [1, 1]} : vector<8x128xi32> to vector<8x1xi32>
    %46 = vector.extract_strided_slice %43 {offsets = [0, 0], sizes = [8, 127], strides = [1, 1]} : vector<8x128xi32> to vector<8x127xi32>
    %47 = tpu.concatenate %45, %46 in 1 : vector<8x1xi32>, vector<8x127xi32> -> vector<8x128xi32>
    %48 = arith.subi %44, %47 : vector<8x128xi32>
    %c0_3 = arith.constant 0 : index
    %c0_4 = arith.constant 0 : index
    %49 = vector.load %arg3[%c0_3, %c0_4] : memref<8x128xi32, #tpu.memory_space<vmem>>, vector<8x128xi32>
    tpu.vector_store %arg3[%c0_3, %c0_4], %48 {strides = array<i32>} : memref<8x128xi32, #tpu.memory_space<vmem>>, vector<8x128xi32>,
    return
  }
  func.func @transform_0(%arg0: i32, %arg1: memref<1xi32, #tpu.memory_space<smem>>) -> (i32, i32) {
    %c0_i32 = arith.constant 0 : i32
    %c0_i32_0 = arith.constant 0 : i32
    return %arg0, %c0_i32 : i32, i32
  }
  func.func @transform_1(%arg0: i32, %arg1: memref<1xi32, #tpu.memory_space<smem>>) -> (i32, i32) {
    %c0_i32 = arith.constant 0 : i32
    %c0_i32_0 = arith.constant 0 : i32
    return %arg0, %c0_i32 : i32, i32
  }
}

</mosaic_0001>

<llo_original>
// kernel: tpu_custom_call.1
$region0: #{tpu_custom_call.1}
  #allocation0 [shape = 'u32[]', space=smem, size = 0x4, offset = 0x4, fixed_abs, tag = 'smem constant byte address 0x4 - core index']
  #allocation1 [shape = 'u32[144,128]{1,0:T(1,128)}', space=vmem, size = 0x12000, scoped, tag = 'internal scratch']
  #allocation2 [shape = 's32[1]{0}', space=sflag, size = 0x4, scoped, tag = 'scoped memory for tpu_custom_call.1']
  #allocation3 [shape = 's32[1]{0:T(128)S(6)}', space=smem, size = 0x200, scoped, tag = 'prefetched SMEM operand 0']
  %s0 = inlined_call_operand.<no memory space> [shape: s32[1], index: 0, kind: input, shape index: {}]
  %s1 = inlined_call_operand.hbm [shape: s32[8,128], index: 1, kind: input, shape index: {}]
  %s2 = inlined_call_operand.hbm [shape: s32[8,128], index: 2, kind: output, shape index: {}]
  %s3 = sld [smem:[#allocation0]]
  $region18: #{tpu_custom_call.1} parent=0
    _
  %s5 = ssub.s32 1, %s3
  %s6 = scalar_select 0, %s5, %s3
  %7 = sst [smem:[#allocation3]] %s0
  $region1: #{tpu_custom_call.1} parent=0
    #allocation4 [shape = 'u8[4096]{0}', space=vmem, size = 0x1000, scoped, tag = 'input window, operand 1, single buffered']
    #allocation5 [shape = 's32[1]{0}', space=sflag, size = 0x4, scoped, tag = 'scoped memory for tpu_custom_call.1']
    #allocation6 [shape = 's32[1]{0}', space=sflag, size = 0x4, scoped, tag = 'scoped memory for tpu_custom_call.1']
    #allocation7 [shape = 'u8[4096]{0}', space=vmem, size = 0x1000, scoped, tag = 'output window, operand 0, single buffered']
    %8 = vsyncpa [#allocation5], 0
    %9 = vsyncpa [#allocation6], 0
    // Predicated region
    $region2: #{tpu_custom_call.1} parent=1 // pred_check
      _
    $region3: #{tpu_custom_call.1} parent=1 // pred_check_branch
      %11 = sbr.rel (0) target = $region5
    $region4: #{tpu_custom_call.1} parent=1 // pred_region
      %s13 = ssub.s32 128, 128
      %14 = vsyncadd [#allocation5], %s13
      %s16 = sshll.u32 [#allocation4], 4
      %s17 = int_to_ptr.vmem [resolvable:$true] %s16
      %19 = dma.hbm_to_vmem [thread:$0]  %s1, 128, %s17, [#allocation5]
    $region5: #{tpu_custom_call.1} parent=1 // pred_fallthru
      _
    // Predicated region
    $region6: #{tpu_custom_call.1} parent=1 // pred_check
      _
    $region7: #{tpu_custom_call.1} parent=1 // pred_check_branch
      %21 = sbr.rel (0) target = $region9
    $region8: #{tpu_custom_call.1} parent=1 // pred_region
      %22 = dma.done [#allocation5], 128
    $region9: #{tpu_custom_call.1} parent=1 // pred_fallthru
      _
    %v23 = vld [vmem:[#allocation4] sm:$0xff]
    %v24 = vlaneseq
    %v25 = vshrl.u32 %v24, 7
    %s26 = smul.u32 0, 8
    %v27 = vstv %s26
    %v28 = vadd.s32 %v25, %v27
    %v29 = vlaneseq
    %v30 = vand.u32 %v29, 127
    %v31 = vshll.u32 %v28, 7
    %v32 = vor.u32 %v31, %v30
    %s33 = sld [smem:[#allocation3]]
    %s34 = smul.u32 %s33, 2654435769
    %v35 = vstv %s34
    %v36 = vxor.u32 %v32, %v35
    %v37 = vmul.u32 %v36, 2246822507
    %v38 = vshrl.u32 %v37, 13
    %v39 = vxor.u32 %v37, %v38
    %v40 = vmul.u32 %v39, 3266489909
    %v41 = vshrl.u32 %v40, 16
    %v42 = vxor.u32 %v40, %v41
    %vm43 = vcmp.lt.s32.totalorder %v30, 127
    %vm44 = vcmp.lt.u32.totalorder %v42, 1288490189
    %vm45 = vmand %vm44, %vm43
    %v46 = vsel %vm45, 1, 0
    %47 = vrot.lane.b32.xlu0 %v46, 1
    %v48 = vpop.permute.xlu0 %47
    %v49 = vxor.u32 %v48, 1
    %v50 = vand.u32 %v46, %v49
    %51 = vrot.lane.b32.xlu0 %v23, 127
    %v52 = vpop.permute.xlu0 %51
    %vm53 = vcmp.ne.s32.totalorder %v50, 0
    %v54 = vsub.s32 %v52, %v23
    %v55 = vsel %vm53, %v54, 0
    %v56 = vadd.s32 %v23, %v55
    %57 = vrot.lane.b32.xlu0 %v55, 1
    %v58 = vpop.permute.xlu0 %57
    %v59 = vsub.s32 %v56, %v58
    %60 = vst [vmem:[#allocation7] sm:$0xff] %v59
    // Predicated region
    $region10: #{tpu_custom_call.1} parent=1 // pred_check
      _
    $region11: #{tpu_custom_call.1} parent=1 // pred_check_branch
      %62 = sbr.rel (0) target = $region13
    $region12: #{tpu_custom_call.1} parent=1 // pred_region
      %s64 = ssub.s32 128, 128
      %65 = vsyncadd [#allocation6], %s64
      %s67 = sshll.u32 [#allocation7], 4
      %s68 = int_to_ptr.vmem [resolvable:$true] %s67
      %70 = dma.vmem_to_hbm [thread:$0]  %s68, 128, %s2, [#allocation6]
    $region13: #{tpu_custom_call.1} parent=1 // pred_fallthru
      _
    // Predicated region
    $region14: #{tpu_custom_call.1} parent=1 // pred_check
      _
    $region15: #{tpu_custom_call.1} parent=1 // pred_check_branch
      %72 = sbr.rel (0) target = $region17
    $region16: #{tpu_custom_call.1} parent=1 // pred_region
      %73 = dma.done [#allocation6], 128
    $region17: #{tpu_custom_call.1} parent=1 // pred_fallthru
      _
    %74 = vsyncpa [#allocation5], 1
    %75 = vsyncpa [#allocation6], 1

</llo_original>
